<compile_context>
chip_gen: v7x
topology: tpu7x:2x2x1
jax: 0.10.0
libtpu: 0.0.40
codegen_flags: <defaults>
</compile_context>

<pallas_src>
import functools

import jax
import jax.numpy as jnp
from jax.experimental import pallas as pl
from jax.experimental.pallas import tpu as pltpu


def _make_kernel(d1, d2, d3):
    """Bakes the static feature-split offsets (matching the PyTorch concat
    order e0 | s12 | s34, i.e. the Linear's input-feature ordering)."""
    o1 = d1
    o2 = d1 + d2
    o3 = d1 + d2 + d3

    def kernel(ws_ref,                                   # SMEM: (4,) fusion weights (f32)
               e0_ref, e1_ref, e2_ref, e3_ref, e4_ref,   # VMEM: (TB, d_i) bf16 tiles
               wT_ref, b_ref,                            # VMEM: (D, D) bf16 W^T, (1, D) f32 bias
               o_ref):                                   # VMEM: (TB, D) output tile
        w1 = ws_ref[0]
        w2 = ws_ref[1]
        w3 = ws_ref[2]
        w4 = ws_ref[3]

        # Weighted sums on the VPU in f32 (v5e has no bf16 VALU; also keeps
        # accuracy); cast to bf16 only for the MXU operands.
        s12 = (w1 * e1_ref[...].astype(jnp.float32)
               + w2 * e2_ref[...].astype(jnp.float32)).astype(jnp.bfloat16)
        s34 = (w3 * e3_ref[...].astype(jnp.float32)
               + w4 * e4_ref[...].astype(jnp.float32)).astype(jnp.bfloat16)

        # Split-K matmul over static sublane row-slices of W^T -> no concat.
        # bf16 x bf16 operands, f32 accumulation on the MXU.
        y = jnp.dot(e0_ref[...], wT_ref[0:o1, :],
                    preferred_element_type=jnp.float32)
        y += jnp.dot(s12, wT_ref[o1:o2, :],
                     preferred_element_type=jnp.float32)
        y += jnp.dot(s34, wT_ref[o2:o3, :],
                     preferred_element_type=jnp.float32)
        y += b_ref[...]

        # LeakyReLU(0.2) == max(y, 0.2*y) since the slope is in (0, 1).
        o_ref[...] = jnp.maximum(y, 0.2 * y).astype(o_ref.dtype)

    return kernel


def _choose_batch_tile(B, row_bytes, *, target=2048, vmem_budget=12 * (1 << 20)):
    """Pick the batch tile TB.

    Constraints applied:
      * TB divides B and is a multiple of 8 (sublane rule), or TB == B.
      * Double-buffered per-step footprint (2 * row_bytes * TB) stays under a
        conservative 12 MiB budget so it fits v5e's 16 MiB default scoped
        VMEM without raising vmem_limit_bytes (v6e/v7x defaults are larger).
      * Prefer >= 2 grid steps so dimension_semantics=("parallel",) can shard
        the batch across both TensorCores on v7x.
      * Target ~2048 rows/step to amortize the ~0.35 us per-grid-step cost.
    """
    max_rows = max(8, vmem_budget // (2 * row_bytes))
    cap = min(target, max_rows)
    if B <= cap:
        half = B // 2
        if B % 2 == 0 and half % 8 == 0 and half > 0:
            return half            # two grid steps -> both v7x TCs get work
        return B                   # single tile (correct, just unsharded)
    # B > cap: find the largest multiple of 8 that divides B and is <= cap.
    tb = (cap // 8) * 8
    while tb >= 8:
        if B % tb == 0:
            return tb              # B > cap >= tb  =>  grid has >= 2 steps
        tb -= 8
    return B                       # fallback: whole batch in one block


def fuse_embeddings4(fuse_weights, e0, e1, e2, e3, e4, W_T, b, *,
                     batch_tile=None, out_dtype=jnp.bfloat16):
    """FuseEmbeddings4 forward.

    fuse_weights: (4,) = [w1, w2, w3, w4]
    e0: (B, d1);  e1, e2: (B, d2);  e3, e4: (B, d3)   (ideally already bf16)
    W_T: (D, D) pre-transposed Linear weight (== torch_weight.T), transposed
         and cast to bf16 ONCE at parameter setup (not per call).
    b:   (D,) Linear bias (kept f32; added to the f32 accumulator).
    """
    B, d1 = e0.shape
    d2 = e1.shape[-1]
    d3 = e3.shape[-1]
    D = d1 + d2 + d3
    assert e1.shape == e2.shape == (B, d2)
    assert e3.shape == e4.shape == (B, d3)
    assert W_T.shape == (D, D) and b.shape == (D,)
    assert fuse_weights.shape == (4,)

    # Producers should emit bf16 to avoid this extra pass; these are no-ops
    # when the inputs already arrive in bf16 (as in the demo below).
    to_bf16 = lambda a: a if a.dtype == jnp.bfloat16 else a.astype(jnp.bfloat16)
    e0, e1, e2, e3, e4 = map(to_bf16, (e0, e1, e2, e3, e4))
    W_T = to_bf16(W_T)
    fuse_weights = fuse_weights.astype(jnp.float32)
    b2 = b.astype(jnp.float32).reshape(1, D)

    # Per-batch-row HBM traffic (bf16 inputs + out_dtype output).
    row_bytes = 2 * (d1 + 2 * d2 + 2 * d3) + D * jnp.dtype(out_dtype).itemsize
    TB = batch_tile if batch_tile is not None else _choose_batch_tile(B, row_bytes)
    assert B % TB == 0, "batch tile must divide batch"
    grid = (B // TB,)

    kernel = _make_kernel(d1, d2, d3)

    grid_spec = pltpu.PrefetchScalarGridSpec(
        num_scalar_prefetch=0,
        grid=grid,
        in_specs=[
            pl.BlockSpec(memory_space=pltpu.SMEM),        # (4,) fusion weights
            pl.BlockSpec((TB, d1), lambda i: (i, 0)),      # e0 tile  (bf16)
            pl.BlockSpec((TB, d2), lambda i: (i, 0)),      # e1 tile  (bf16)
            pl.BlockSpec((TB, d2), lambda i: (i, 0)),      # e2 tile  (bf16)
            pl.BlockSpec((TB, d3), lambda i: (i, 0)),      # e3 tile  (bf16)
            pl.BlockSpec((TB, d3), lambda i: (i, 0)),      # e4 tile  (bf16)
            pl.BlockSpec((D, D), lambda i: (0, 0)),        # W^T, VMEM-resident (bf16)
            pl.BlockSpec((1, D), lambda i: (0, 0)),        # bias, VMEM-resident (f32)
        ],
        out_specs=pl.BlockSpec((TB, D), lambda i: (i, 0)),
    )

    return pl.pallas_call(
        kernel,
        out_shape=jax.ShapeDtypeStruct((B, D), out_dtype),
        grid_spec=grid_spec,
        compiler_params=pltpu.CompilerParams(
            # Batch tiles are independent -> megacore-shardable on v7x.
            dimension_semantics=("parallel",),
        ),
    )(fuse_weights, e0, e1, e2, e3, e4, W_T, b2)


def reference_bf16(fuse_weights, e0, e1, e2, e3, e4, W, b):
    """Pure-JAX reference that mirrors the kernel's numerics:
    bf16-rounded operands into the matmul, f32 accumulation, f32 weighted
    sums, bf16 output."""
    f32 = jnp.float32
    bf = lambda a: a.astype(jnp.bfloat16).astype(f32)
    w1, w2, w3, w4 = fuse_weights.astype(f32)
    s12 = w1 * bf(e1) + w2 * bf(e2)
    s34 = w3 * bf(e3) + w4 * bf(e4)
    x = jnp.concatenate([bf(e0), bf(s12), bf(s34)], axis=-1)
    y = x @ bf(W).T + b.astype(f32)
    out = jnp.where(y >= 0, y, 0.2 * y)
    return out.astype(jnp.bfloat16)


if __name__ == "__main__":
    # Small shapes consistent with the module; batch large enough that the
    # tile chooser produces a 2-step parallel grid (TB = 128, grid = (2,)).
    batch = 256
    d1, d2, d3 = 32, 64, 32          # embed_dim1, embed_dim2, embed_dim3
    D = d1 + d2 + d3                 # 128

    key = jax.random.PRNGKey(0)
    keys = jax.random.split(key, 8)

    e0 = jax.random.normal(keys[0], (batch, d1), dtype=jnp.float32)
    e1 = jax.random.normal(keys[1], (batch, d2), dtype=jnp.float32)
    e2 = jax.random.normal(keys[2], (batch, d2), dtype=jnp.float32)
    e3 = jax.random.normal(keys[3], (batch, d3), dtype=jnp.float32)
    e4 = jax.random.normal(keys[4], (batch, d3), dtype=jnp.float32)

    # Parameters (PyTorch init shapes): weight1..4 ~ U[0,1); Linear(D, D).
    fuse_weights = jax.random.uniform(keys[5], (4,), dtype=jnp.float32)
    bound = 1.0 / (D ** 0.5)
    W = jax.random.uniform(keys[6], (D, D), dtype=jnp.float32,
                           minval=-bound, maxval=bound)
    b = jax.random.uniform(keys[7], (D,), dtype=jnp.float32,
                           minval=-bound, maxval=bound)

    # Producer side: transpose + cast ONCE at parameter-setup time, and emit
    # the embeddings in bf16 so the hot path carries half the HBM bytes.
    W_T = jax.block_until_ready(W.T.astype(jnp.bfloat16))
    e0_b, e1_b, e2_b, e3_b, e4_b = (a.astype(jnp.bfloat16)
                                    for a in (e0, e1, e2, e3, e4))

    out = fuse_embeddings4(fuse_weights, e0_b, e1_b, e2_b, e3_b, e4_b, W_T, b)
    out = jax.block_until_ready(out)

    ref = reference_bf16(fuse_weights, e0, e1, e2, e3, e4, W, b)
    assert out.shape == (batch, D)
    assert out.dtype == jnp.bfloat16
    # bf16 operands/output: compare against the bf16-aware reference with a
    # tolerance covering one-ulp output rounding / accumulation-order diffs.
    assert jnp.allclose(out.astype(jnp.float32), ref.astype(jnp.float32),
                        atol=2e-2, rtol=2e-2), "mismatch vs bf16 reference"

    print("KERNEL_OK")
</pallas_src>

<mosaic_0001>
module attributes {stable_mosaic.version = 11 : i64} {
  func.func @kernel(%arg0: i32, %arg1: memref<4xf32, #tpu.memory_space<smem>>, %arg2: memref<128x32xbf16, #tpu.memory_space<vmem>>, %arg3: memref<128x64xbf16, #tpu.memory_space<vmem>>, %arg4: memref<128x64xbf16, #tpu.memory_space<vmem>>, %arg5: memref<128x32xbf16, #tpu.memory_space<vmem>>, %arg6: memref<128x32xbf16, #tpu.memory_space<vmem>>, %arg7: memref<128x128xbf16, #tpu.memory_space<vmem>>, %arg8: memref<1x128xf32, #tpu.memory_space<vmem>>, %arg9: memref<128x128xbf16, #tpu.memory_space<vmem>>) attributes {dimension_semantics = [#tpu.dimension_semantics<parallel>], iteration_bounds = array<i64: 2>, scalar_prefetch = 0 : i64, scratch_operands = 0 : i64, tpu.core_type = #tpu.core_type<tc>, window_params = [{transform_indices = @transform_0, window_bounds = array<i64: 4>}, {transform_indices = @transform_1, window_bounds = array<i64: 128, 32>}, {transform_indices = @transform_2, window_bounds = array<i64: 128, 64>}, {transform_indices = @transform_3, window_bounds = array<i64: 128, 64>}, {transform_indices = @transform_4, window_bounds = array<i64: 128, 32>}, {transform_indices = @transform_5, window_bounds = array<i64: 128, 32>}, {pipeline_mode = #tpu.pipeline_mode<synchronous>, transform_indices = @transform_6, window_bounds = array<i64: 128, 128>}, {pipeline_mode = #tpu.pipeline_mode<synchronous>, transform_indices = @transform_7, window_bounds = array<i64: 1, 128>}, {transform_indices = @transform_8, window_bounds = array<i64: 128, 128>}]} {
    %c0 = arith.constant 0 : index
    %0 = memref.load %arg1[%c0] : memref<4xf32, #tpu.memory_space<smem>>
    %c1 = arith.constant 1 : index
    %1 = memref.load %arg1[%c1] : memref<4xf32, #tpu.memory_space<smem>>
    %c2 = arith.constant 2 : index
    %2 = memref.load %arg1[%c2] : memref<4xf32, #tpu.memory_space<smem>>
    %c3 = arith.constant 3 : index
    %3 = memref.load %arg1[%c3] : memref<4xf32, #tpu.memory_space<smem>>
    %c0_0 = arith.constant 0 : index
    %c0_1 = arith.constant 0 : index
    %4 = vector.load %arg3[%c0_0, %c0_1] : memref<128x64xbf16, #tpu.memory_space<vmem>>, vector<128x64xbf16>
    %5 = arith.extf %4 : vector<128x64xbf16> to vector<128x64xf32>
    %6 = vector.broadcast %0 : f32 to vector<128x64xf32>
    %7 = arith.mulf %6, %5 : vector<128x64xf32>
    %c0_2 = arith.constant 0 : index
    %c0_3 = arith.constant 0 : index
    %8 = vector.load %arg4[%c0_2, %c0_3] : memref<128x64xbf16, #tpu.memory_space<vmem>>, vector<128x64xbf16>
    %9 = arith.extf %8 : vector<128x64xbf16> to vector<128x64xf32>
    %10 = vector.broadcast %1 : f32 to vector<128x64xf32>
    %11 = arith.mulf %10, %9 : vector<128x64xf32>
    %12 = arith.addf %7, %11 : vector<128x64xf32>
    %13 = arith.truncf %12 : vector<128x64xf32> to vector<128x64xbf16>
    %c0_4 = arith.constant 0 : index
    %c0_5 = arith.constant 0 : index
    %14 = vector.load %arg5[%c0_4, %c0_5] : memref<128x32xbf16, #tpu.memory_space<vmem>>, vector<128x32xbf16>
    %15 = arith.extf %14 : vector<128x32xbf16> to vector<128x32xf32>
    %16 = vector.broadcast %2 : f32 to vector<128x32xf32>
    %17 = arith.mulf %16, %15 : vector<128x32xf32>
    %c0_6 = arith.constant 0 : index
    %c0_7 = arith.constant 0 : index
    %18 = vector.load %arg6[%c0_6, %c0_7] : memref<128x32xbf16, #tpu.memory_space<vmem>>, vector<128x32xbf16>
    %19 = arith.extf %18 : vector<128x32xbf16> to vector<128x32xf32>
    %20 = vector.broadcast %3 : f32 to vector<128x32xf32>
    %21 = arith.mulf %20, %19 : vector<128x32xf32>
    %22 = arith.addf %17, %21 : vector<128x32xf32>
    %23 = arith.truncf %22 : vector<128x32xf32> to vector<128x32xbf16>
    %c0_8 = arith.constant 0 : index
    %c0_9 = arith.constant 0 : index
    %24 = vector.load %arg2[%c0_8, %c0_9] : memref<128x32xbf16, #tpu.memory_space<vmem>>, vector<128x32xbf16>
    %c0_10 = arith.constant 0 : index
    %c0_11 = arith.constant 0 : index
    %25 = vector.load %arg7[%c0_10, %c0_11] : memref<128x128xbf16, #tpu.memory_space<vmem>>, vector<32x128xbf16>
    %cst = arith.constant dense<0.000000e+00> : vector<128x128xf32>
    %26 = tpu.matmul %24, %25, %cst {dimension_numbers = #tpu.dot_dimension_numbers<[1], [0], [0], [1], [0, 0, 1, 1], [], []>} : vector<128x32xbf16>, vector<32x128xbf16>, vector<128x128xf32> -> vector<128x128xf32>
    %c32 = arith.constant 32 : index
    %c0_12 = arith.constant 0 : index
    %27 = vector.load %arg7[%c32, %c0_12] : memref<128x128xbf16, #tpu.memory_space<vmem>>, vector<64x128xbf16>
    %cst_13 = arith.constant dense<0.000000e+00> : vector<128x128xf32>
    %28 = tpu.matmul %13, %27, %cst_13 {dimension_numbers = #tpu.dot_dimension_numbers<[1], [0], [0], [1], [0, 0, 1, 1], [], []>} : vector<128x64xbf16>, vector<64x128xbf16>, vector<128x128xf32> -> vector<128x128xf32>
    %29 = arith.addf %26, %28 : vector<128x128xf32>
    %c96 = arith.constant 96 : index
    %c0_14 = arith.constant 0 : index
    %30 = vector.load %arg7[%c96, %c0_14] : memref<128x128xbf16, #tpu.memory_space<vmem>>, vector<32x128xbf16>
    %cst_15 = arith.constant dense<0.000000e+00> : vector<128x128xf32>
    %31 = tpu.matmul %23, %30, %cst_15 {dimension_numbers = #tpu.dot_dimension_numbers<[1], [0], [0], [1], [0, 0, 1, 1], [], []>} : vector<128x32xbf16>, vector<32x128xbf16>, vector<128x128xf32> -> vector<128x128xf32>
    %32 = arith.addf %29, %31 : vector<128x128xf32>
    %c0_16 = arith.constant 0 : index
    %c0_17 = arith.constant 0 : index
    %33 = vector.load %arg8[%c0_16, %c0_17] : memref<1x128xf32, #tpu.memory_space<vmem>>, vector<1x128xf32>
    %34 = vector.broadcast %33 : vector<1x128xf32> to vector<128x128xf32>
    %35 = arith.addf %32, %34 : vector<128x128xf32>
    %cst_18 = arith.constant 2.000000e-01 : f32
    %36 = vector.broadcast %cst_18 : f32 to vector<128x128xf32>
    %37 = arith.mulf %36, %35 : vector<128x128xf32>
    %38 = arith.maximumf %35, %37 : vector<128x128xf32>
    %39 = arith.truncf %38 : vector<128x128xf32> to vector<128x128xbf16>
    %c0_19 = arith.constant 0 : index
    %c0_20 = arith.constant 0 : index
    %40 = vector.load %arg9[%c0_19, %c0_20] : memref<128x128xbf16, #tpu.memory_space<vmem>>, vector<128x128xbf16>
    tpu.vector_store %arg9[%c0_19, %c0_20], %39 {strides = array<i32>} : memref<128x128xbf16, #tpu.memory_space<vmem>>, vector<128x128xbf16>,
    return
  }
  func.func @transform_0(%arg0: i32) -> i32 {
    %c0_i32 = arith.constant 0 : i32
    %c0_i32_0 = arith.constant 0 : i32
    return %c0_i32 : i32
  }
  func.func @transform_1(%arg0: i32) -> (i32, i32) {
    %c0_i32 = arith.constant 0 : i32
    %c0_i32_0 = arith.constant 0 : i32
    return %arg0, %c0_i32 : i32, i32
  }
  func.func @transform_2(%arg0: i32) -> (i32, i32) {
    %c0_i32 = arith.constant 0 : i32
    %c0_i32_0 = arith.constant 0 : i32
    return %arg0, %c0_i32 : i32, i32
  }
  func.func @transform_3(%arg0: i32) -> (i32, i32) {
    %c0_i32 = arith.constant 0 : i32
    %c0_i32_0 = arith.constant 0 : i32
    return %arg0, %c0_i32 : i32, i32
  }
  func.func @transform_4(%arg0: i32) -> (i32, i32) {
    %c0_i32 = arith.constant 0 : i32
    %c0_i32_0 = arith.constant 0 : i32
    return %arg0, %c0_i32 : i32, i32
  }
  func.func @transform_5(%arg0: i32) -> (i32, i32) {
    %c0_i32 = arith.constant 0 : i32
    %c0_i32_0 = arith.constant 0 : i32
    return %arg0, %c0_i32 : i32, i32
  }
  func.func @transform_6(%arg0: i32) -> (i32, i32) {
    %c0_i32 = arith.constant 0 : i32
    %c0_i32_0 = arith.constant 0 : i32
    %c0_i32_1 = arith.constant 0 : i32
    return %c0_i32, %c0_i32_0 : i32, i32
  }
  func.func @transform_7(%arg0: i32) -> (i32, i32) {
    %c0_i32 = arith.constant 0 : i32
    %c0_i32_0 = arith.constant 0 : i32
    %c0_i32_1 = arith.constant 0 : i32
    return %c0_i32, %c0_i32_0 : i32, i32
  }
  func.func @transform_8(%arg0: i32) -> (i32, i32) {
    %c0_i32 = arith.constant 0 : i32
    %c0_i32_0 = arith.constant 0 : i32
    return %arg0, %c0_i32 : i32, i32
  }
}

</mosaic_0001>

<llo_original>
// kernel: tpu_custom_call.1
$region0: #{tpu_custom_call.1}
  #allocation0 [shape = 'u32[]', space=smem, size = 0x4, offset = 0x4, fixed_abs, tag = 'smem constant byte address 0x4 - core index']
  #allocation1 [shape = 'u32[144,128]{1,0:T(1,128)}', space=vmem, size = 0x12000, scoped, tag = 'internal scratch']
  %s0 = inlined_call_operand.vmem [shape: f32[4], index: 0, kind: input, shape index: {}]
  %s1 = inlined_call_operand.vmem [shape: bf16[256,32], index: 1, kind: input, shape index: {}]
  %s2 = inlined_call_operand.vmem [shape: bf16[256,64], index: 2, kind: input, shape index: {}]
  %s3 = inlined_call_operand.vmem [shape: bf16[256,64], index: 3, kind: input, shape index: {}]
  %s4 = inlined_call_operand.vmem [shape: bf16[256,32], index: 4, kind: input, shape index: {}]
  %s5 = inlined_call_operand.vmem [shape: bf16[256,32], index: 5, kind: input, shape index: {}]
  %s6 = inlined_call_operand.vmem [shape: bf16[128,128], index: 6, kind: input, shape index: {}]
  %s7 = inlined_call_operand.vmem [shape: f32[1,128], index: 7, kind: input, shape index: {}]
  %s8 = inlined_call_operand.hbm [shape: bf16[256,128], index: 8, kind: output, shape index: {}]
  %s9 = sld [smem:[#allocation0]]
  $region69: #{tpu_custom_call.1} parent=0
    _
  %s11 = ssub.s32 1, %s9
  %s12 = scalar_select 0, %s11, %s9
  $region1: #{tpu_custom_call.1} parent=0
    #allocation2 [shape = 'u8[512]{0}', space=smem, size = 0x200, scoped, tag = 'input window, operand 0, single buffered']
    #allocation3 [shape = 's32[2]{0}', space=sflag, size = 0x8, scoped, tag = 'scoped memory for tpu_custom_call.1']
    #allocation4 [shape = 's32[2]{0}', space=sflag, size = 0x8, scoped, tag = 'scoped memory for tpu_custom_call.1']
    #allocation5 [shape = 'u8[65536]{0}', space=vmem, size = 0x10000, scoped, tag = 'output window, operand 0']
    %13 = vsyncpa [#allocation4], 0
    %14 = vsyncpa [#allocation3], 0
    %s15 = scalar_lea.sflag [#allocation3], 1
    %16 = vsyncpa %s15, 0
    loop: start=0, step=1, limit=4
    $region2: #{tpu_custom_call.1} parent=1 // loop_pre_header
      _
    $region3: #{tpu_custom_call.1} parent=1 // loop_header
      %s18 = sphi 0, %s22
      %p19 = scmp.ge.s32.totalorder %s18, 4
      %s26 = sphi 0, %s26
      %s28 = sphi 0, %s26
      %s29 = sphi 0, %s28
      %s43 = sphi 0, %s29
      %s49 = sphi 0, %s51
      %s52 = sphi 0, %s49
      %s53 = sphi 0, %s52
      %s69 = sphi 0, %s53
      %s75 = sphi 0, %s77
      %s78 = sphi 0, %s75
      %s79 = sphi 0, %s78
      %s95 = sphi 0, %s79
      %s101 = sphi 0, %s103
      %s104 = sphi 0, %s101
      %s105 = sphi 0, %s104
      %s121 = sphi 0, %s105
      %s127 = sphi 0, %s129
      %s130 = sphi 0, %s127
      %s131 = sphi 0, %s130
      %s147 = sphi 0, %s131
      %s153 = sphi 0, %s155
      %s156 = sphi 0, %s153
      %s157 = sphi 0, %s156
      %s173 = sphi 0, %s157
      %s177 = sphi 0, %s177
      %s179 = sphi 0, %s177
      %s180 = sphi 0, %s179
      %s194 = sphi 0, %s180
      %s198 = sphi 0, %s198
      %s200 = sphi 0, %s198
      %s201 = sphi 0, %s200
      %s215 = sphi 0, %s201
      %s221 = sphi 0, %s223
      %s224 = sphi 0, %s221
      %s225 = sphi 0, %s224
      %s241 = sphi 0, %s225
    $region4: #{tpu_custom_call.1} parent=1 // loop_header_branch
      %21 = sbr.rel (%p19) target = $region8
    $region5: #{tpu_custom_call.1} parent=1 // loop_body
      %s23 = ssub.s32 %s18, 1
      %s24 = ssub.s32 %s18, 2
      %s25 = sadd.s32 %s18, 1
      %s27 = sadd.s32 %s26, 1
      %p30 = scmp.eq.s32.totalorder %s18, 1
      %p31 = scmp.ne.s32.totalorder %s26, %s28
      %p32 = scmp.eq.s32.totalorder %s18, 0
      %p33 = por %p31, %p32
      %p34 = scmp.ne.s32.totalorder %s26, %s28
      %p35 = scmp.eq.s32.totalorder %s23, 1
      %p36 = por %p34, %p35
      %p37 = scmp.ne.s32.totalorder %s28, %s29
      %p38 = scmp.eq.s32.totalorder %s23, 0
      %p39 = por %p37, %p38
      %p40 = scmp.ne.s32.totalorder %s28, %s29
      %p41 = scmp.eq.s32.totalorder %s24, 1
      %p42 = por %p40, %p41
      %p44 = scmp.ne.s32.totalorder %s29, %s43
      %p45 = scmp.eq.s32.totalorder %s24, 0
      %p46 = por %p44, %p45
      %s47 = ssub.s32 %s18, %s25
      %p48 = scmp.eq.s32.totalorder %s47, 0
      %s50 = sadd.s32 %s49, 1
      %s51 = scalar_select %p48, %s49, %s50
      %p54 = pneg %p48
      %p55 = scmp.eq.s32.totalorder %s18, 1
      %p56 = por %p54, %p55
      %p57 = scmp.ne.s32.totalorder %s49, %s52
      %p58 = scmp.eq.s32.totalorder %s18, 0
      %p59 = por %p57, %p58
      %p60 = scmp.ne.s32.totalorder %s49, %s52
      %p61 = scmp.eq.s32.totalorder %s23, 1
      %p62 = por %p60, %p61
      %p63 = scmp.ne.s32.totalorder %s52, %s53
      %p64 = scmp.eq.s32.totalorder %s23, 0
      %p65 = por %p63, %p64
      %p66 = scmp.ne.s32.totalorder %s52, %s53
      %p67 = scmp.eq.s32.totalorder %s24, 1
      %p68 = por %p66, %p67
      %p70 = scmp.ne.s32.totalorder %s53, %s69
      %p71 = scmp.eq.s32.totalorder %s24, 0
      %p72 = por %p70, %p71
      %s73 = ssub.s32 %s18, %s25
      %p74 = scmp.eq.s32.totalorder %s73, 0
      %s76 = sadd.s32 %s75, 1
      %s77 = scalar_select %p74, %s75, %s76
      %p80 = pneg %p74
      %p81 = scmp.eq.s32.totalorder %s18, 1
      %p82 = por %p80, %p81
      %p83 = scmp.ne.s32.totalorder %s75, %s78
      %p84 = scmp.eq.s32.totalorder %s18, 0
      %p85 = por %p83, %p84
      %p86 = scmp.ne.s32.totalorder %s75, %s78
      %p87 = scmp.eq.s32.totalorder %s23, 1
      %p88 = por %p86, %p87
      %p89 = scmp.ne.s32.totalorder %s78, %s79
      %p90 = scmp.eq.s32.totalorder %s23, 0
      %p91 = por %p89, %p90
      %p92 = scmp.ne.s32.totalorder %s78, %s79
      %p93 = scmp.eq.s32.totalorder %s24, 1
      %p94 = por %p92, %p93
      %p96 = scmp.ne.s32.totalorder %s79, %s95
      %p97 = scmp.eq.s32.totalorder %s24, 0
      %p98 = por %p96, %p97
      %s99 = ssub.s32 %s18, %s25
      %p100 = scmp.eq.s32.totalorder %s99, 0
      %s102 = sadd.s32 %s101, 1
      %s103 = scalar_select %p100, %s101, %s102
      %p106 = pneg %p100
      %p107 = scmp.eq.s32.totalorder %s18, 1
      %p108 = por %p106, %p107
      %p109 = scmp.ne.s32.totalorder %s101, %s104
      %p110 = scmp.eq.s32.totalorder %s18, 0
      %p111 = por %p109, %p110
      %p112 = scmp.ne.s32.totalorder %s101, %s104
      %p113 = scmp.eq.s32.totalorder %s23, 1
      %p114 = por %p112, %p113
      %p115 = scmp.ne.s32.totalorder %s104, %s105
      %p116 = scmp.eq.s32.totalorder %s23, 0
      %p117 = por %p115, %p116
      %p118 = scmp.ne.s32.totalorder %s104, %s105
      %p119 = scmp.eq.s32.totalorder %s24, 1
      %p120 = por %p118, %p119
      %p122 = scmp.ne.s32.totalorder %s105, %s121
      %p123 = scmp.eq.s32.totalorder %s24, 0
      %p124 = por %p122, %p123
      %s125 = ssub.s32 %s18, %s25
      %p126 = scmp.eq.s32.totalorder %s125, 0
      %s128 = sadd.s32 %s127, 1
      %s129 = scalar_select %p126, %s127, %s128
      %p132 = pneg %p126
      %p133 = scmp.eq.s32.totalorder %s18, 1
      %p134 = por %p132, %p133
      %p135 = scmp.ne.s32.totalorder %s127, %s130
      %p136 = scmp.eq.s32.totalorder %s18, 0
      %p137 = por %p135, %p136
      %p138 = scmp.ne.s32.totalorder %s127, %s130
      %p139 = scmp.eq.s32.totalorder %s23, 1
      %p140 = por %p138, %p139
      %p141 = scmp.ne.s32.totalorder %s130, %s131
      %p142 = scmp.eq.s32.totalorder %s23, 0
      %p143 = por %p141, %p142
      %p144 = scmp.ne.s32.totalorder %s130, %s131
      %p145 = scmp.eq.s32.totalorder %s24, 1
      %p146 = por %p144, %p145
      %p148 = scmp.ne.s32.totalorder %s131, %s147
      %p149 = scmp.eq.s32.totalorder %s24, 0
      %p150 = por %p148, %p149
      %s151 = ssub.s32 %s18, %s25
      %p152 = scmp.eq.s32.totalorder %s151, 0
      %s154 = sadd.s32 %s153, 1
      %s155 = scalar_select %p152, %s153, %s154
      %p158 = pneg %p152
      %p159 = scmp.eq.s32.totalorder %s18, 1
      %p160 = por %p158, %p159
      %p161 = scmp.ne.s32.totalorder %s153, %s156
      %p162 = scmp.eq.s32.totalorder %s18, 0
      %p163 = por %p161, %p162
      %p164 = scmp.ne.s32.totalorder %s153, %s156
      %p165 = scmp.eq.s32.totalorder %s23, 1
      %p166 = por %p164, %p165
      %p167 = scmp.ne.s32.totalorder %s156, %s157
      %p168 = scmp.eq.s32.totalorder %s23, 0
      %p169 = por %p167, %p168
      %p170 = scmp.ne.s32.totalorder %s156, %s157
      %p171 = scmp.eq.s32.totalorder %s24, 1
      %p172 = por %p170, %p171
      %p174 = scmp.ne.s32.totalorder %s157, %s173
      %p175 = scmp.eq.s32.totalorder %s24, 0
      %p176 = por %p174, %p175
      %s178 = sadd.s32 %s177, 1
      %p181 = scmp.eq.s32.totalorder %s18, 1
      %p182 = scmp.ne.s32.totalorder %s177, %s179
      %p183 = scmp.eq.s32.totalorder %s18, 0
      %p184 = por %p182, %p183
      %p185 = scmp.ne.s32.totalorder %s177, %s179
      %p186 = scmp.eq.s32.totalorder %s23, 1
      %p187 = por %p185, %p186
      %p188 = scmp.ne.s32.totalorder %s179, %s180
      %p189 = scmp.eq.s32.totalorder %s23, 0
      %p190 = por %p188, %p189
      %p191 = scmp.ne.s32.totalorder %s179, %s180
      %p192 = scmp.eq.s32.totalorder %s24, 1
      %p193 = por %p191, %p192
      %p195 = scmp.ne.s32.totalorder %s180, %s194
      %p196 = scmp.eq.s32.totalorder %s24, 0
      %p197 = por %p195, %p196
      %s199 = sadd.s32 %s198, 1
      %p202 = scmp.eq.s32.totalorder %s18, 1
      %p203 = scmp.ne.s32.totalorder %s198, %s200
      %p204 = scmp.eq.s32.totalorder %s18, 0
      %p205 = por %p203, %p204
      %p206 = scmp.ne.s32.totalorder %s198, %s200
      %p207 = scmp.eq.s32.totalorder %s23, 1
      %p208 = por %p206, %p207
      %p209 = scmp.ne.s32.totalorder %s200, %s201
      %p210 = scmp.eq.s32.totalorder %s23, 0
      %p211 = por %p209, %p210
      %p212 = scmp.ne.s32.totalorder %s200, %s201
      %p213 = scmp.eq.s32.totalorder %s24, 1
      %p214 = por %p212, %p213
      %p216 = scmp.ne.s32.totalorder %s201, %s215
      %p217 = scmp.eq.s32.totalorder %s24, 0
      %p218 = por %p216, %p217
      %s219 = ssub.s32 %s18, %s25
      %p220 = scmp.eq.s32.totalorder %s219, 0
      %s222 = sadd.s32 %s221, 1
      %s223 = scalar_select %p220, %s221, %s222
      %p226 = pneg %p220
      %p227 = scmp.eq.s32.totalorder %s18, 1
      %p228 = por %p226, %p227
      %p229 = scmp.ne.s32.totalorder %s221, %s224
      %p230 = scmp.eq.s32.totalorder %s18, 0
      %p231 = por %p229, %p230
      %p232 = scmp.ne.s32.totalorder %s221, %s224
      %p233 = scmp.eq.s32.totalorder %s23, 1
      %p234 = por %p232, %p233
      %p235 = scmp.ne.s32.totalorder %s224, %s225
      %p236 = scmp.eq.s32.totalorder %s23, 0
      %p237 = por %p235, %p236
      %p238 = scmp.ne.s32.totalorder %s224, %s225
      %p239 = scmp.eq.s32.totalorder %s24, 1
      %p240 = por %p238, %p239
      %p242 = scmp.ne.s32.totalorder %s225, %s241
      %p243 = scmp.eq.s32.totalorder %s24, 0
      %p244 = por %p242, %p243
      %p245 = scmp.le.s32.totalorder 1, %s18
      %p246 = scmp.lt.s32.totalorder %s18, 3
      %p247 = pnand %p245, %p246
      %p248 = pneg %p247
      // Predicated region
      $region9: #{tpu_custom_call.1} parent=5 // pred_check
        _
      $region10: #{tpu_custom_call.1} parent=5 // pred_check_branch
        %250 = sbr.rel (%p247) target = $region12
      $region11: #{tpu_custom_call.1} parent=5 // pred_region
        %s251 = ssub.s32 %s18, 1
        // Predicated region
        $region13: #{tpu_custom_call.1} parent=11 // pred_check
          %p252 = pneg %p39
        $region14: #{tpu_custom_call.1} parent=11 // pred_check_branch
          %254 = sbr.rel (%p252) target = $region16
        $region15: #{tpu_custom_call.1} parent=11 // pred_region
          %s256 = ssub.s32 16, 16
          %257 = vsyncadd [#allocation4], %s256
          %s259 = sshll.u32 %s0, 4
          %s260 = int_to_ptr.vmem [resolvable:$true] %s259
          %262 = dma.vmem_to_smem %s260, 16, [#allocation2], [#allocation4]
        $region16: #{tpu_custom_call.1} parent=11 // pred_fallthru
          _
        // Predicated region
        $region17: #{tpu_custom_call.1} parent=11 // pred_check
          %p263 = pneg %p190
        $region18: #{tpu_custom_call.1} parent=11 // pred_check_branch
          %265 = sbr.rel (%p263) target = $region20
        $region19: #{tpu_custom_call.1} parent=11 // pred_region
          _
        $region20: #{tpu_custom_call.1} parent=11 // pred_fallthru
          _
        // Predicated region
        $region21: #{tpu_custom_call.1} parent=11 // pred_check
          %p266 = pneg %p211
        $region22: #{tpu_custom_call.1} parent=11 // pred_check_branch
          %268 = sbr.rel (%p266) target = $region24
        $region23: #{tpu_custom_call.1} parent=11 // pred_region
          _
        $region24: #{tpu_custom_call.1} parent=11 // pred_fallthru
          _
      $region12: #{tpu_custom_call.1} parent=5 // pred_fallthru
        _
      %p269 = scmp.lt.s32.totalorder %s18, 2
      // Predicated region
      $region25: #{tpu_custom_call.1} parent=5 // pred_check
        %p270 = pneg %p269
      $region26: #{tpu_custom_call.1} parent=5 // pred_check_branch
        %272 = sbr.rel (%p270) target = $region28
      $region27: #{tpu_custom_call.1} parent=5 // pred_region
        // Predicated region
        $region29: #{tpu_custom_call.1} parent=27 // pred_check
          %p273 = pneg %p59
        $region30: #{tpu_custom_call.1} parent=27 // pred_check_branch
          %275 = sbr.rel (%p273) target = $region32
        $region31: #{tpu_custom_call.1} parent=27 // pred_region
          %s276 = smul.u32 16, %s18
          %p277 = scmp.lt.s32.totalorder %s276, 31
          %s278 = scalar_select %p277, %s276, 31
          %s279 = smul.addr %s278, 4
          %s280 = scalar_lea.vmem %s1, %s279
          %s281 = smul.u32 16, %s18
        $region32: #{tpu_custom_call.1} parent=27 // pred_fallthru
          _
        // Predicated region
        $region33: #{tpu_custom_call.1} parent=27 // pred_check
          %p282 = pneg %p85
        $region34: #{tpu_custom_call.1} parent=27 // pred_check_branch
          %284 = sbr.rel (%p282) target = $region36
        $region35: #{tpu_custom_call.1} parent=27 // pred_region
          %s285 = smul.u32 16, %s18
          %p286 = scmp.lt.s32.totalorder %s285, 31
          %s287 = scalar_select %p286, %s285, 31
          %s288 = smul.addr %s287, 4
          %s289 = scalar_lea.vmem %s2, %s288
          %s290 = smul.u32 16, %s18
        $region36: #{tpu_custom_call.1} parent=27 // pred_fallthru
          _
        // Predicated region
        $region37: #{tpu_custom_call.1} parent=27 // pred_check
          %p291 = pneg %p111
        $region38: #{tpu_custom_call.1} parent=27 // pred_check_branch
          %293 = sbr.rel (%p291) target = $region40
        $region39: #{tpu_custom_call.1} parent=27 // pred_region
          %s294 = smul.u32 16, %s18
          %p295 = scmp.lt.s32.totalorder %s294, 31
          %s296 = scalar_select %p295, %s294, 31
          %s297 = smul.addr %s296, 4
          %s298 = scalar_lea.vmem %s3, %s297
          %s299 = smul.u32 16, %s18
        $region40: #{tpu_custom_call.1} parent=27 // pred_fallthru
          _
        // Predicated region
        $region41: #{tpu_custom_call.1} parent=27 // pred_check
          %p300 = pneg %p137
        $region42: #{tpu_custom_call.1} parent=27 // pred_check_branch
          %302 = sbr.rel (%p300) target = $region44
        $region43: #{tpu_custom_call.1} parent=27 // pred_region
          %s303 = smul.u32 16, %s18
          %p304 = scmp.lt.s32.totalorder %s303, 31
          %s305 = scalar_select %p304, %s303, 31
          %s306 = smul.addr %s305, 4
          %s307 = scalar_lea.vmem %s4, %s306
          %s308 = smul.u32 16, %s18
        $region44: #{tpu_custom_call.1} parent=27 // pred_fallthru
          _
        // Predicated region
        $region45: #{tpu_custom_call.1} parent=27 // pred_check
          %p309 = pneg %p163
        $region46: #{tpu_custom_call.1} parent=27 // pred_check_branch
          %311 = sbr.rel (%p309) target = $region48
        $region47: #{tpu_custom_call.1} parent=27 // pred_region
          %s312 = smul.u32 16, %s18
          %p313 = scmp.lt.s32.totalorder %s312, 31
          %s314 = scalar_select %p313, %s312, 31
          %s315 = smul.addr %s314, 4
          %s316 = scalar_lea.vmem %s5, %s315
          %s317 = smul.u32 16, %s18
        $region48: #{tpu_custom_call.1} parent=27 // pred_fallthru
          _
      $region28: #{tpu_custom_call.1} parent=5 // pred_fallthru
        _
      %p318 = scmp.le.s32.totalorder 1, %s18
      %p319 = scmp.lt.s32.totalorder %s18, 3
      %p320 = pnand %p318, %p319
      %p321 = pneg %p320
      // Predicated region
      $region49: #{tpu_custom_call.1} parent=5 // pred_check
        _
      $region50: #{tpu_custom_call.1} parent=5 // pred_check_branch
        %323 = sbr.rel (%p320) target = $region52
      $region51: #{tpu_custom_call.1} parent=5 // pred_region
        %s324 = ssub.s32 %s18, 1
        // Predicated region
        $region53: #{tpu_custom_call.1} parent=51 // pred_check
          %p325 = pneg %p39
        $region54: #{tpu_custom_call.1} parent=51 // pred_check_branch
          %327 = sbr.rel (%p325) target = $region56
        $region55: #{tpu_custom_call.1} parent=51 // pred_region
          %328 = dma.done [#allocation4], 16
        $region56: #{tpu_custom_call.1} parent=51 // pred_fallthru
          _
        %329 = sfence
        %p330 = pneg %p39
        %p331 = pneg %p36
        %s332 = smul.u32 16, %s23
        %p333 = scmp.lt.s32.totalorder %s332, 31
        %s334 = scalar_select %p333, %s332, 31
        %s335 = smul.addr %s334, 4
        %s336 = scalar_lea.vmem %s1, %s335
        %p337 = pneg %p65
        %p338 = pneg %p62
        %s339 = smul.u32 16, %s23
        %p340 = scmp.lt.s32.totalorder %s339, 31
        %s341 = scalar_select %p340, %s339, 31
        %s342 = smul.addr %s341, 4
        %s343 = scalar_lea.vmem %s2, %s342
        %p344 = pneg %p91
        %p345 = pneg %p88
        %s346 = smul.u32 16, %s23
        %p347 = scmp.lt.s32.totalorder %s346, 31
        %s348 = scalar_select %p347, %s346, 31
        %s349 = smul.addr %s348, 4
        %s350 = scalar_lea.vmem %s3, %s349
        %p351 = pneg %p117
        %p352 = pneg %p114
        %s353 = smul.u32 16, %s23
        %p354 = scmp.lt.s32.totalorder %s353, 31
        %s355 = scalar_select %p354, %s353, 31
        %s356 = smul.addr %s355, 4
        %s357 = scalar_lea.vmem %s4, %s356
        %p358 = pneg %p143
        %p359 = pneg %p140
        %s360 = smul.u32 16, %s23
        %p361 = scmp.lt.s32.totalorder %s360, 31
        %s362 = scalar_select %p361, %s360, 31
        %s363 = smul.addr %s362, 4
        %s364 = scalar_lea.vmem %s5, %s363
        %p365 = pneg %p169
        %p366 = pneg %p166
        %p367 = pneg %p190
        %p368 = pneg %p187
        %p369 = pneg %p211
        %p370 = pneg %p208
        %p371 = pneg %p237
        %p372 = pneg %p234
        %s373 = sand.u32 %s224, 1
        %s374 = scalar_lea.sflag [#allocation3], %s373
        %s375 = sand.u32 %s224, 1
        %s376 = smul.addr %s375, 64
        %s377 = scalar_lea.vmem [#allocation5], %s376
        %s378 = smul.u32 16, %s23
        %p379 = scmp.lt.s32.totalorder %s378, 31
        %s380 = scalar_select %p379, %s378, 31
        %s381 = smul.addr %s380, 4
        %s382 = scalar_lea.vmem %s1, %s381
        %s383 = smul.u32 16, %s23
        %s384 = smul.u32 16, %s23
        %p385 = scmp.lt.s32.totalorder %s384, 31
        %s386 = scalar_select %p385, %s384, 31
        %s387 = smul.addr %s386, 4
        %s388 = scalar_lea.vmem %s2, %s387
        %s389 = smul.u32 16, %s23
        %s390 = smul.u32 16, %s23
        %p391 = scmp.lt.s32.totalorder %s390, 31
        %s392 = scalar_select %p391, %s390, 31
        %s393 = smul.addr %s392, 4
        %s394 = scalar_lea.vmem %s3, %s393
        %s395 = smul.u32 16, %s23
        %s396 = smul.u32 16, %s23
        %p397 = scmp.lt.s32.totalorder %s396, 31
        %s398 = scalar_select %p397, %s396, 31
        %s399 = smul.addr %s398, 4
        %s400 = scalar_lea.vmem %s4, %s399
        %s401 = smul.u32 16, %s23
        %s402 = smul.u32 16, %s23
        %p403 = scmp.lt.s32.totalorder %s402, 31
        %s404 = scalar_select %p403, %s402, 31
        %s405 = smul.addr %s404, 4
        %s406 = scalar_lea.vmem %s5, %s405
        %s407 = smul.u32 16, %s23
        %s408 = smul.u32 16, %s23
        %s410 = sld [smem:[#allocation2]]
        %s411 = sld [smem:[#allocation2 + $0x1]]
        %s412 = sld [smem:[#allocation2 + $0x2]]
        %s413 = sld [smem:[#allocation2 + $0x3]]
        %v414 = vld [vmem:[%s388] sm:$0xf]
        %v415 = vld [vmem:[%s388 + $0x4] sm:$0xf]
        %v416 = vld [vmem:[%s388 + $0x8] sm:$0xf]
        %v417 = vld [vmem:[%s388 + $0xc] sm:$0xf]
        %v418 = vld [vmem:[%s388 + $0x10] sm:$0xf]
        %v419 = vld [vmem:[%s388 + $0x14] sm:$0xf]
        %v420 = vld [vmem:[%s388 + $0x18] sm:$0xf]
        %v421 = vld [vmem:[%s388 + $0x1c] sm:$0xf]
        %v422 = vld [vmem:[%s388 + $0x20] sm:$0xf]
        %v423 = vld [vmem:[%s388 + $0x24] sm:$0xf]
        %v424 = vld [vmem:[%s388 + $0x28] sm:$0xf]
        %v425 = vld [vmem:[%s388 + $0x2c] sm:$0xf]
        %v426 = vld [vmem:[%s388 + $0x30] sm:$0xf]
        %v427 = vld [vmem:[%s388 + $0x34] sm:$0xf]
        %v428 = vld [vmem:[%s388 + $0x38] sm:$0xf]
        %v429 = vld [vmem:[%s388 + $0x3c] sm:$0xf]
        %v430 = vunpack.c.l.bf16 %v414
        %v431 = vunpack.c.l.bf16 %v415
        %v432 = vunpack.c.l.bf16 %v416
        %v433 = vunpack.c.l.bf16 %v417
        %v434 = vunpack.c.l.bf16 %v418
        %v435 = vunpack.c.l.bf16 %v419
        %v436 = vunpack.c.l.bf16 %v420
        %v437 = vunpack.c.l.bf16 %v421
        %v438 = vunpack.c.l.bf16 %v422
        %v439 = vunpack.c.l.bf16 %v423
        %v440 = vunpack.c.l.bf16 %v424
        %v441 = vunpack.c.l.bf16 %v425
        %v442 = vunpack.c.l.bf16 %v426
        %v443 = vunpack.c.l.bf16 %v427
        %v444 = vunpack.c.l.bf16 %v428
        %v445 = vunpack.c.l.bf16 %v429
        %v446 = vstv %s410
        %v447 = vmul.f32 %v446, %v430
        %v448 = vmul.f32 %v446, %v431
        %v449 = vmul.f32 %v446, %v432
        %v450 = vmul.f32 %v446, %v433
        %v451 = vmul.f32 %v446, %v434
        %v452 = vmul.f32 %v446, %v435
        %v453 = vmul.f32 %v446, %v436
        %v454 = vmul.f32 %v446, %v437
        %v455 = vmul.f32 %v446, %v438
        %v456 = vmul.f32 %v446, %v439
        %v457 = vmul.f32 %v446, %v440
        %v458 = vmul.f32 %v446, %v441
        %v459 = vmul.f32 %v446, %v442
        %v460 = vmul.f32 %v446, %v443
        %v461 = vmul.f32 %v446, %v444
        %v462 = vmul.f32 %v446, %v445
        %v463 = vld [vmem:[%s394] sm:$0xf]
        %v464 = vld [vmem:[%s394 + $0x4] sm:$0xf]
        %v465 = vld [vmem:[%s394 + $0x8] sm:$0xf]
        %v466 = vld [vmem:[%s394 + $0xc] sm:$0xf]
        %v467 = vld [vmem:[%s394 + $0x10] sm:$0xf]
        %v468 = vld [vmem:[%s394 + $0x14] sm:$0xf]
        %v469 = vld [vmem:[%s394 + $0x18] sm:$0xf]
        %v470 = vld [vmem:[%s394 + $0x1c] sm:$0xf]
        %v471 = vld [vmem:[%s394 + $0x20] sm:$0xf]
        %v472 = vld [vmem:[%s394 + $0x24] sm:$0xf]
        %v473 = vld [vmem:[%s394 + $0x28] sm:$0xf]
        %v474 = vld [vmem:[%s394 + $0x2c] sm:$0xf]
        %v475 = vld [vmem:[%s394 + $0x30] sm:$0xf]
        %v476 = vld [vmem:[%s394 + $0x34] sm:$0xf]
        %v477 = vld [vmem:[%s394 + $0x38] sm:$0xf]
        %v478 = vld [vmem:[%s394 + $0x3c] sm:$0xf]
        %v479 = vunpack.c.l.bf16 %v463
        %v480 = vunpack.c.l.bf16 %v464
        %v481 = vunpack.c.l.bf16 %v465
        %v482 = vunpack.c.l.bf16 %v466
        %v483 = vunpack.c.l.bf16 %v467
        %v484 = vunpack.c.l.bf16 %v468
        %v485 = vunpack.c.l.bf16 %v469
        %v486 = vunpack.c.l.bf16 %v470
        %v487 = vunpack.c.l.bf16 %v471
        %v488 = vunpack.c.l.bf16 %v472
        %v489 = vunpack.c.l.bf16 %v473
        %v490 = vunpack.c.l.bf16 %v474
        %v491 = vunpack.c.l.bf16 %v475
        %v492 = vunpack.c.l.bf16 %v476
        %v493 = vunpack.c.l.bf16 %v477
        %v494 = vunpack.c.l.bf16 %v478
        %v495 = vstv %s411
        %v496 = vmul.f32 %v495, %v479
        %v497 = vmul.f32 %v495, %v480
        %v498 = vmul.f32 %v495, %v481
        %v499 = vmul.f32 %v495, %v482
        %v500 = vmul.f32 %v495, %v483
        %v501 = vmul.f32 %v495, %v484
        %v502 = vmul.f32 %v495, %v485
        %v503 = vmul.f32 %v495, %v486
        %v504 = vmul.f32 %v495, %v487
        %v505 = vmul.f32 %v495, %v488
        %v506 = vmul.f32 %v495, %v489
        %v507 = vmul.f32 %v495, %v490
        %v508 = vmul.f32 %v495, %v491
        %v509 = vmul.f32 %v495, %v492
        %v510 = vmul.f32 %v495, %v493
        %v511 = vmul.f32 %v495, %v494
        %v512 = vadd.f32 %v447, %v496
        %v513 = vadd.f32 %v448, %v497
        %v514 = vadd.f32 %v449, %v498
        %v515 = vadd.f32 %v450, %v499
        %v516 = vadd.f32 %v451, %v500
        %v517 = vadd.f32 %v452, %v501
        %v518 = vadd.f32 %v453, %v502
        %v519 = vadd.f32 %v454, %v503
        %v520 = vadd.f32 %v455, %v504
        %v521 = vadd.f32 %v456, %v505
        %v522 = vadd.f32 %v457, %v506
        %v523 = vadd.f32 %v458, %v507
        %v524 = vadd.f32 %v459, %v508
        %v525 = vadd.f32 %v460, %v509
        %v526 = vadd.f32 %v461, %v510
        %v527 = vadd.f32 %v462, %v511
        %v528 = vpack.c.bf16 %v513, %v512
        %v529 = vpack.c.bf16 %v515, %v514
        %v530 = vpack.c.bf16 %v517, %v516
        %v531 = vpack.c.bf16 %v519, %v518
        %v532 = vpack.c.bf16 %v521, %v520
        %v533 = vpack.c.bf16 %v523, %v522
        %v534 = vpack.c.bf16 %v525, %v524
        %v535 = vpack.c.bf16 %v527, %v526
        %v536 = vld [vmem:[%s400] sm:$0xf]
        %v537 = vld [vmem:[%s400 + $0x4] sm:$0xf]
        %v538 = vld [vmem:[%s400 + $0x8] sm:$0xf]
        %v539 = vld [vmem:[%s400 + $0xc] sm:$0xf]
        %v540 = vld [vmem:[%s400 + $0x10] sm:$0xf]
        %v541 = vld [vmem:[%s400 + $0x14] sm:$0xf]
        %v542 = vld [vmem:[%s400 + $0x18] sm:$0xf]
        %v543 = vld [vmem:[%s400 + $0x1c] sm:$0xf]
        %v544 = vld [vmem:[%s400 + $0x20] sm:$0xf]
        %v545 = vld [vmem:[%s400 + $0x24] sm:$0xf]
        %v546 = vld [vmem:[%s400 + $0x28] sm:$0xf]
        %v547 = vld [vmem:[%s400 + $0x2c] sm:$0xf]
        %v548 = vld [vmem:[%s400 + $0x30] sm:$0xf]
        %v549 = vld [vmem:[%s400 + $0x34] sm:$0xf]
        %v550 = vld [vmem:[%s400 + $0x38] sm:$0xf]
        %v551 = vld [vmem:[%s400 + $0x3c] sm:$0xf]
        %v552 = vunpack.c.l.bf16 %v536
        %v553 = vunpack.c.l.bf16 %v537
        %v554 = vunpack.c.l.bf16 %v538
        %v555 = vunpack.c.l.bf16 %v539
        %v556 = vunpack.c.l.bf16 %v540
        %v557 = vunpack.c.l.bf16 %v541
        %v558 = vunpack.c.l.bf16 %v542
        %v559 = vunpack.c.l.bf16 %v543
        %v560 = vunpack.c.l.bf16 %v544
        %v561 = vunpack.c.l.bf16 %v545
        %v562 = vunpack.c.l.bf16 %v546
        %v563 = vunpack.c.l.bf16 %v547
        %v564 = vunpack.c.l.bf16 %v548
        %v565 = vunpack.c.l.bf16 %v549
        %v566 = vunpack.c.l.bf16 %v550
        %v567 = vunpack.c.l.bf16 %v551
        %v568 = vstv %s412
        %v569 = vmul.f32 %v568, %v552
        %v570 = vmul.f32 %v568, %v553
        %v571 = vmul.f32 %v568, %v554
        %v572 = vmul.f32 %v568, %v555
        %v573 = vmul.f32 %v568, %v556
        %v574 = vmul.f32 %v568, %v557
        %v575 = vmul.f32 %v568, %v558
        %v576 = vmul.f32 %v568, %v559
        %v577 = vmul.f32 %v568, %v560
        %v578 = vmul.f32 %v568, %v561
        %v579 = vmul.f32 %v568, %v562
        %v580 = vmul.f32 %v568, %v563
        %v581 = vmul.f32 %v568, %v564
        %v582 = vmul.f32 %v568, %v565
        %v583 = vmul.f32 %v568, %v566
        %v584 = vmul.f32 %v568, %v567
        %v585 = vld [vmem:[%s406] sm:$0xf]
        %v586 = vld [vmem:[%s406 + $0x4] sm:$0xf]
        %v587 = vld [vmem:[%s406 + $0x8] sm:$0xf]
        %v588 = vld [vmem:[%s406 + $0xc] sm:$0xf]
        %v589 = vld [vmem:[%s406 + $0x10] sm:$0xf]
        %v590 = vld [vmem:[%s406 + $0x14] sm:$0xf]
        %v591 = vld [vmem:[%s406 + $0x18] sm:$0xf]
        %v592 = vld [vmem:[%s406 + $0x1c] sm:$0xf]
        %v593 = vld [vmem:[%s406 + $0x20] sm:$0xf]
        %v594 = vld [vmem:[%s406 + $0x24] sm:$0xf]
        %v595 = vld [vmem:[%s406 + $0x28] sm:$0xf]
        %v596 = vld [vmem:[%s406 + $0x2c] sm:$0xf]
        %v597 = vld [vmem:[%s406 + $0x30] sm:$0xf]
        %v598 = vld [vmem:[%s406 + $0x34] sm:$0xf]
        %v599 = vld [vmem:[%s406 + $0x38] sm:$0xf]
        %v600 = vld [vmem:[%s406 + $0x3c] sm:$0xf]
        %v601 = vunpack.c.l.bf16 %v585
        %v602 = vunpack.c.l.bf16 %v586
        %v603 = vunpack.c.l.bf16 %v587
        %v604 = vunpack.c.l.bf16 %v588
        %v605 = vunpack.c.l.bf16 %v589
        %v606 = vunpack.c.l.bf16 %v590
        %v607 = vunpack.c.l.bf16 %v591
        %v608 = vunpack.c.l.bf16 %v592
        %v609 = vunpack.c.l.bf16 %v593
        %v610 = vunpack.c.l.bf16 %v594
        %v611 = vunpack.c.l.bf16 %v595
        %v612 = vunpack.c.l.bf16 %v596
        %v613 = vunpack.c.l.bf16 %v597
        %v614 = vunpack.c.l.bf16 %v598
        %v615 = vunpack.c.l.bf16 %v599
        %v616 = vunpack.c.l.bf16 %v600
        %v617 = vstv %s413
        %v618 = vmul.f32 %v617, %v601
        %v619 = vmul.f32 %v617, %v602
        %v620 = vmul.f32 %v617, %v603
        %v621 = vmul.f32 %v617, %v604
        %v622 = vmul.f32 %v617, %v605
        %v623 = vmul.f32 %v617, %v606
        %v624 = vmul.f32 %v617, %v607
        %v625 = vmul.f32 %v617, %v608
        %v626 = vmul.f32 %v617, %v609
        %v627 = vmul.f32 %v617, %v610
        %v628 = vmul.f32 %v617, %v611
        %v629 = vmul.f32 %v617, %v612
        %v630 = vmul.f32 %v617, %v613
        %v631 = vmul.f32 %v617, %v614
        %v632 = vmul.f32 %v617, %v615
        %v633 = vmul.f32 %v617, %v616
        %v634 = vadd.f32 %v569, %v618
        %v635 = vadd.f32 %v570, %v619
        %v636 = vadd.f32 %v571, %v620
        %v637 = vadd.f32 %v572, %v621
        %v638 = vadd.f32 %v573, %v622
        %v639 = vadd.f32 %v574, %v623
        %v640 = vadd.f32 %v575, %v624
        %v641 = vadd.f32 %v576, %v625
        %v642 = vadd.f32 %v577, %v626
        %v643 = vadd.f32 %v578, %v627
        %v644 = vadd.f32 %v579, %v628
        %v645 = vadd.f32 %v580, %v629
        %v646 = vadd.f32 %v581, %v630
        %v647 = vadd.f32 %v582, %v631
        %v648 = vadd.f32 %v583, %v632
        %v649 = vadd.f32 %v584, %v633
        %v650 = vpack.c.bf16 %v635, %v634
        %v651 = vpack.c.bf16 %v637, %v636
        %v652 = vpack.c.bf16 %v639, %v638
        %v653 = vpack.c.bf16 %v641, %v640
        %v654 = vpack.c.bf16 %v643, %v642
        %v655 = vpack.c.bf16 %v645, %v644
        %v656 = vpack.c.bf16 %v647, %v646
        %v657 = vpack.c.bf16 %v649, %v648
        %v658 = vld [vmem:[%s382] sm:$0xf]
        %v659 = vld [vmem:[%s382 + $0x4] sm:$0xf]
        %v660 = vld [vmem:[%s382 + $0x8] sm:$0xf]
        %v661 = vld [vmem:[%s382 + $0xc] sm:$0xf]
        %v662 = vld [vmem:[%s382 + $0x10] sm:$0xf]
        %v663 = vld [vmem:[%s382 + $0x14] sm:$0xf]
        %v664 = vld [vmem:[%s382 + $0x18] sm:$0xf]
        %v665 = vld [vmem:[%s382 + $0x1c] sm:$0xf]
        %v666 = vld [vmem:[%s382 + $0x20] sm:$0xf]
        %v667 = vld [vmem:[%s382 + $0x24] sm:$0xf]
        %v668 = vld [vmem:[%s382 + $0x28] sm:$0xf]
        %v669 = vld [vmem:[%s382 + $0x2c] sm:$0xf]
        %v670 = vld [vmem:[%s382 + $0x30] sm:$0xf]
        %v671 = vld [vmem:[%s382 + $0x34] sm:$0xf]
        %v672 = vld [vmem:[%s382 + $0x38] sm:$0xf]
        %v673 = vld [vmem:[%s382 + $0x3c] sm:$0xf]
        %v674 = vld [vmem:[%s6] sm:$0xf]
        %v675 = vld [vmem:[%s6 + $0x4] sm:$0xf]
        %v676 = vld [vmem:[%s6 + $0x8] sm:$0xf]
        %v677 = vld [vmem:[%s6 + $0xc] sm:$0xf]
        %v678 = vld [vmem:[%s6 + $0x10] sm:$0xf]
        %v679 = vld [vmem:[%s6 + $0x14] sm:$0xf]
        %v680 = vld [vmem:[%s6 + $0x18] sm:$0xf]
        %v681 = vld [vmem:[%s6 + $0x1c] sm:$0xf]
        %v682 = vld [vmem:[%s6 + $0x20] sm:$0xf]
        %v683 = vld [vmem:[%s6 + $0x24] sm:$0xf]
        %v684 = vld [vmem:[%s6 + $0x28] sm:$0xf]
        %v685 = vld [vmem:[%s6 + $0x2c] sm:$0xf]
        %v694 = vunpack.c.l.b16 %v678
        %v695 = vunpack.c.l.b16 %v679
        %v696 = vunpack.c.l.b16 %v680
        %v697 = vunpack.c.l.b16 %v681
        %v698 = vunpack.c.l.b16 %v682
        %v699 = vunpack.c.l.b16 %v683
        %v700 = vunpack.c.l.b16 %v684
        %v701 = vunpack.c.l.b16 %v685
        %v702 = vpack.c.b16 %v695, %v694
        %v703 = vpack.c.b16 %v697, %v696
        %v704 = vpack.c.b16 %v699, %v698
        %v705 = vpack.c.b16 %v701, %v700
        %vm710 = vcmask 523264
        %v712 = vsel %vm710, %v528, 0
        %v715 = vsel %vm710, %v529, 0
        %v718 = vsel %vm710, %v530, 0
        %v721 = vsel %vm710, %v531, 0
        %v724 = vsel %vm710, %v532, 0
        %v727 = vsel %vm710, %v533, 0
        %v730 = vsel %vm710, %v534, 0
        %v733 = vsel %vm710, %v535, 0
        %735 = vmatprep.subr.bf16.mxu0 0
        %736 = vmatpush1.bf16.msra.mxu0 %v702
        %737 = vmatprep.subr.bf16.mxu0 0
        %738 = vmatpush1.bf16.msra.mxu0 %v703
        %739 = vmatprep.subr.bf16.mxu0 0
        %740 = vmatpush1.bf16.msra.mxu0 %v704
        %741 = vmatprep.subr.bf16.mxu0 0
        %742 = vmatpush1.bf16.msra.mxu0 %v705
        %743 = vmatprep.subr.bf16.mxu0 0
        %744 = vmatpush1.bf16.msra.mxu0 0
        %745 = vmatprep.subr.bf16.mxu0 0
        %746 = vmatpush1.bf16.msra.mxu0 0
        %747 = vmatprep.subr.bf16.mxu0 0
        %748 = vmatpush1.bf16.msra.mxu0 0
        %749 = vmatprep.subr.bf16.mxu0 0
        %750 = vmatpush1.bf16.msra.mxu0 0
        %751 = vmatprep.subr.bf16.mxu0 0
        %752 = vmatpush1.bf16.msra.mxu0 0
        %753 = vmatprep.subr.bf16.mxu0 0
        %754 = vmatpush1.bf16.msra.mxu0 0
        %755 = vmatprep.subr.bf16.mxu0 0
        %756 = vmatpush1.bf16.msra.mxu0 0
        %757 = vmatprep.subr.bf16.mxu0 0
        %758 = vmatpush1.bf16.msra.mxu0 0
        %759 = vmatprep.subr.bf16.mxu0 0
        %760 = vmatpush1.bf16.msra.mxu0 0
        %761 = vmatprep.subr.bf16.mxu0 0
        %762 = vmatpush1.bf16.msra.mxu0 0
        %763 = vmatprep.subr.bf16.mxu0 0
        %764 = vmatpush1.bf16.msra.mxu0 0
        %765 = vmatprep.subr.bf16.mxu0 0
        %766 = vmatpush1.bf16.msra.mxu0 0
        %767 = vmatprep.mubr.bf16.mxu0 0
        %768 = vmatmul.mubr.bf16.gmra.mrb[0].mxu0 %v712
        %v769 = vpop.f32.mrb[0].mxu0
        %v770 = vadd.f32 0.0, %v769
        %v771 = vpop.f32.mrb[0].mxu0
        %v772 = vpop.f32.mrb[0].mxu0
        %v773 = vadd.f32 0.0, %v772
        %v774 = vpop.f32.mrb[0].mxu0
        %775 = vmatprep.mubr.bf16.mxu0 0
        %776 = vmatmul.mubr.bf16.gmra.mrb[0].mxu0 %v715
        %v777 = vpop.f32.mrb[0].mxu0
        %v778 = vadd.f32 0.0, %v777
        %v779 = vpop.f32.mrb[0].mxu0
        %v780 = vpop.f32.mrb[0].mxu0
        %v781 = vadd.f32 0.0, %v780
        %v782 = vpop.f32.mrb[0].mxu0
        %783 = vmatprep.mubr.bf16.mxu0 0
        %784 = vmatmul.mubr.bf16.gmra.mrb[0].mxu0 %v718
        %v785 = vpop.f32.mrb[0].mxu0
        %v786 = vadd.f32 0.0, %v785
        %v787 = vpop.f32.mrb[0].mxu0
        %v788 = vpop.f32.mrb[0].mxu0
        %v789 = vadd.f32 0.0, %v788
        %v790 = vpop.f32.mrb[0].mxu0
        %791 = vmatprep.mubr.bf16.mxu0 0
        %792 = vmatmul.mubr.bf16.gmra.mrb[0].mxu0 %v721
        %v793 = vpop.f32.mrb[0].mxu0
        %v794 = vadd.f32 0.0, %v793
        %v795 = vpop.f32.mrb[0].mxu0
        %v796 = vpop.f32.mrb[0].mxu0
        %v797 = vadd.f32 0.0, %v796
        %v798 = vpop.f32.mrb[0].mxu0
        %799 = vmatprep.mubr.bf16.mxu0 0
        %800 = vmatmul.mubr.bf16.gmra.mrb[0].mxu0 %v724
        %v801 = vpop.f32.mrb[0].mxu0
        %v802 = vadd.f32 0.0, %v801
        %v803 = vpop.f32.mrb[0].mxu0
        %v804 = vpop.f32.mrb[0].mxu0
        %v805 = vadd.f32 0.0, %v804
        %v806 = vpop.f32.mrb[0].mxu0
        %807 = vmatprep.mubr.bf16.mxu0 0
        %808 = vmatmul.mubr.bf16.gmra.mrb[0].mxu0 %v727
        %v809 = vpop.f32.mrb[0].mxu0
        %v810 = vadd.f32 0.0, %v809
        %v811 = vpop.f32.mrb[0].mxu0
        %v812 = vpop.f32.mrb[0].mxu0
        %v813 = vadd.f32 0.0, %v812
        %v814 = vpop.f32.mrb[0].mxu0
        %815 = vmatprep.mubr.bf16.mxu0 0
        %816 = vmatmul.mubr.bf16.gmra.mrb[0].mxu0 %v730
        %v817 = vpop.f32.mrb[0].mxu0
        %v818 = vadd.f32 0.0, %v817
        %v819 = vpop.f32.mrb[0].mxu0
        %v820 = vpop.f32.mrb[0].mxu0
        %v821 = vadd.f32 0.0, %v820
        %v822 = vpop.f32.mrb[0].mxu0
        %823 = vmatprep.mubr.bf16.mxu0 0
        %824 = vmatmul.mubr.bf16.gmra.mrb[0].mxu0 %v733
        %v825 = vpop.f32.mrb[0].mxu0
        %v826 = vadd.f32 0.0, %v825
        %v827 = vpop.f32.mrb[0].mxu0
        %v828 = vpop.f32.mrb[0].mxu0
        %v829 = vadd.f32 0.0, %v828
        %v830 = vpop.f32.mrb[0].mxu0
        %831 = vdwg.mxu0
        %v848 = vunpack.c.l.b16 %v658
        %v849 = vunpack.c.l.b16 %v659
        %v850 = vunpack.c.l.b16 %v660
        %v851 = vunpack.c.l.b16 %v661
        %v852 = vunpack.c.l.b16 %v662
        %v853 = vunpack.c.l.b16 %v663
        %v854 = vunpack.c.l.b16 %v664
        %v855 = vunpack.c.l.b16 %v665
        %v856 = vunpack.c.l.b16 %v666
        %v857 = vunpack.c.l.b16 %v667
        %v858 = vunpack.c.l.b16 %v668
        %v859 = vunpack.c.l.b16 %v669
        %v860 = vunpack.c.l.b16 %v670
        %v861 = vunpack.c.l.b16 %v671
        %v862 = vunpack.c.l.b16 %v672
        %v863 = vunpack.c.l.b16 %v673
        %v864 = vpack.c.b16 %v849, %v848
        %v865 = vpack.c.b16 %v851, %v850
        %v866 = vpack.c.b16 %v853, %v852
        %v867 = vpack.c.b16 %v855, %v854
        %v868 = vpack.c.b16 %v857, %v856
        %v869 = vpack.c.b16 %v859, %v858
        %v870 = vpack.c.b16 %v861, %v860
        %v871 = vpack.c.b16 %v863, %v862
        %v876 = vunpack.c.l.b16 %v674
        %v877 = vunpack.c.l.b16 %v675
        %v878 = vunpack.c.l.b16 %v676
        %v879 = vunpack.c.l.b16 %v677
        %v880 = vpack.c.b16 %v877, %v876
        %v881 = vpack.c.b16 %v879, %v878
        %vm884 = vcmask 261120
        %v886 = vsel %vm884, %v864, 0
        %v889 = vsel %vm884, %v865, 0
        %v892 = vsel %vm884, %v866, 0
        %v895 = vsel %vm884, %v867, 0
        %v898 = vsel %vm884, %v868, 0
        %v901 = vsel %vm884, %v869, 0
        %v904 = vsel %vm884, %v870, 0
        %v907 = vsel %vm884, %v871, 0
        %909 = vmatprep.subr.bf16.mxu0 0
        %910 = vmatpush1.bf16.msra.mxu0 %v880
        %911 = vmatprep.subr.bf16.mxu0 0
        %912 = vmatpush1.bf16.msra.mxu0 %v881
        %913 = vmatprep.subr.bf16.mxu0 0
        %914 = vmatpush1.bf16.msra.mxu0 0
        %915 = vmatprep.subr.bf16.mxu0 0
        %916 = vmatpush1.bf16.msra.mxu0 0
        %917 = vmatprep.subr.bf16.mxu0 0
        %918 = vmatpush1.bf16.msra.mxu0 0
        %919 = vmatprep.subr.bf16.mxu0 0
        %920 = vmatpush1.bf16.msra.mxu0 0
        %921 = vmatprep.subr.bf16.mxu0 0
        %922 = vmatpush1.bf16.msra.mxu0 0
        %923 = vmatprep.subr.bf16.mxu0 0
        %924 = vmatpush1.bf16.msra.mxu0 0
        %925 = vmatprep.subr.bf16.mxu0 0
        %926 = vmatpush1.bf16.msra.mxu0 0
        %927 = vmatprep.subr.bf16.mxu0 0
        %928 = vmatpush1.bf16.msra.mxu0 0
        %929 = vmatprep.subr.bf16.mxu0 0
        %930 = vmatpush1.bf16.msra.mxu0 0
        %931 = vmatprep.subr.bf16.mxu0 0
        %932 = vmatpush1.bf16.msra.mxu0 0
        %933 = vmatprep.subr.bf16.mxu0 0
        %934 = vmatpush1.bf16.msra.mxu0 0
        %935 = vmatprep.subr.bf16.mxu0 0
        %936 = vmatpush1.bf16.msra.mxu0 0
        %937 = vmatprep.subr.bf16.mxu0 0
        %938 = vmatpush1.bf16.msra.mxu0 0
        %939 = vmatprep.subr.bf16.mxu0 0
        %940 = vmatpush1.bf16.msra.mxu0 0
        %941 = vmatprep.mubr.bf16.mxu0 0
        %942 = vmatmul.mubr.bf16.gmra.mrb[0].mxu0 %v886
        %v943 = vpop.f32.mrb[0].mxu0
        %v944 = vadd.f32 %v770, %v943
        %v945 = vpop.f32.mrb[0].mxu0
        %v946 = vpop.f32.mrb[0].mxu0
        %v947 = vadd.f32 %v773, %v946
        %v948 = vpop.f32.mrb[0].mxu0
        %949 = vmatprep.mubr.bf16.mxu0 0
        %950 = vmatmul.mubr.bf16.gmra.mrb[0].mxu0 %v889
        %v951 = vpop.f32.mrb[0].mxu0
        %v952 = vadd.f32 %v778, %v951
        %v953 = vpop.f32.mrb[0].mxu0
        %v954 = vpop.f32.mrb[0].mxu0
        %v955 = vadd.f32 %v781, %v954
        %v956 = vpop.f32.mrb[0].mxu0
        %957 = vmatprep.mubr.bf16.mxu0 0
        %958 = vmatmul.mubr.bf16.gmra.mrb[0].mxu0 %v892
        %v959 = vpop.f32.mrb[0].mxu0
        %v960 = vadd.f32 %v786, %v959
        %v961 = vpop.f32.mrb[0].mxu0
        %v962 = vpop.f32.mrb[0].mxu0
        %v963 = vadd.f32 %v789, %v962
        %v964 = vpop.f32.mrb[0].mxu0
        %965 = vmatprep.mubr.bf16.mxu0 0
        %966 = vmatmul.mubr.bf16.gmra.mrb[0].mxu0 %v895
        %v967 = vpop.f32.mrb[0].mxu0
        %v968 = vadd.f32 %v794, %v967
        %v969 = vpop.f32.mrb[0].mxu0
        %v970 = vpop.f32.mrb[0].mxu0
        %v971 = vadd.f32 %v797, %v970
        %v972 = vpop.f32.mrb[0].mxu0
        %973 = vmatprep.mubr.bf16.mxu0 0
        %974 = vmatmul.mubr.bf16.gmra.mrb[0].mxu0 %v898
        %v975 = vpop.f32.mrb[0].mxu0
        %v976 = vadd.f32 %v802, %v975
        %v977 = vpop.f32.mrb[0].mxu0
        %v978 = vpop.f32.mrb[0].mxu0
        %v979 = vadd.f32 %v805, %v978
        %v980 = vpop.f32.mrb[0].mxu0
        %981 = vmatprep.mubr.bf16.mxu0 0
        %982 = vmatmul.mubr.bf16.gmra.mrb[0].mxu0 %v901
        %v983 = vpop.f32.mrb[0].mxu0
        %v984 = vadd.f32 %v810, %v983
        %v985 = vpop.f32.mrb[0].mxu0
        %v986 = vpop.f32.mrb[0].mxu0
        %v987 = vadd.f32 %v813, %v986
        %v988 = vpop.f32.mrb[0].mxu0
        %989 = vmatprep.mubr.bf16.mxu0 0
        %990 = vmatmul.mubr.bf16.gmra.mrb[0].mxu0 %v904
        %v991 = vpop.f32.mrb[0].mxu0
        %v992 = vadd.f32 %v818, %v991
        %v993 = vpop.f32.mrb[0].mxu0
        %v994 = vpop.f32.mrb[0].mxu0
        %v995 = vadd.f32 %v821, %v994
        %v996 = vpop.f32.mrb[0].mxu0
        %997 = vmatprep.mubr.bf16.mxu0 0
        %998 = vmatmul.mubr.bf16.gmra.mrb[0].mxu0 %v907
        %v999 = vpop.f32.mrb[0].mxu0
        %v1000 = vadd.f32 %v826, %v999
        %v1001 = vpop.f32.mrb[0].mxu0
        %v1002 = vpop.f32.mrb[0].mxu0
        %v1003 = vadd.f32 %v829, %v1002
        %v1004 = vpop.f32.mrb[0].mxu0
        %1005 = vdwg.mxu0
        %v1006 = vld [vmem:[%s6 + $0x30] sm:$0xf]
        %v1007 = vld [vmem:[%s6 + $0x34] sm:$0xf]
        %v1008 = vld [vmem:[%s6 + $0x38] sm:$0xf]
        %v1009 = vld [vmem:[%s6 + $0x3c] sm:$0xf]
        %v1014 = vunpack.c.l.b16 %v1006
        %v1015 = vunpack.c.l.b16 %v1007
        %v1016 = vunpack.c.l.b16 %v1008
        %v1017 = vunpack.c.l.b16 %v1009
        %v1018 = vpack.c.b16 %v1015, %v1014
        %v1019 = vpack.c.b16 %v1017, %v1016
        %v1023 = vsel %vm884, %v650, 0
        %v1026 = vsel %vm884, %v651, 0
        %v1029 = vsel %vm884, %v652, 0
        %v1032 = vsel %vm884, %v653, 0
        %v1035 = vsel %vm884, %v654, 0
        %v1038 = vsel %vm884, %v655, 0
        %v1041 = vsel %vm884, %v656, 0
        %v1044 = vsel %vm884, %v657, 0
        %1046 = vmatprep.subr.bf16.mxu0 0
        %1047 = vmatpush1.bf16.msra.mxu0 %v1018
        %1048 = vmatprep.subr.bf16.mxu0 0
        %1049 = vmatpush1.bf16.msra.mxu0 %v1019
        %1050 = vmatprep.subr.bf16.mxu0 0
        %1051 = vmatpush1.bf16.msra.mxu0 0
        %1052 = vmatprep.subr.bf16.mxu0 0
        %1053 = vmatpush1.bf16.msra.mxu0 0
        %1054 = vmatprep.subr.bf16.mxu0 0
        %1055 = vmatpush1.bf16.msra.mxu0 0
        %1056 = vmatprep.subr.bf16.mxu0 0
        %1057 = vmatpush1.bf16.msra.mxu0 0
        %1058 = vmatprep.subr.bf16.mxu0 0
        %1059 = vmatpush1.bf16.msra.mxu0 0
        %1060 = vmatprep.subr.bf16.mxu0 0
        %1061 = vmatpush1.bf16.msra.mxu0 0
        %1062 = vmatprep.subr.bf16.mxu0 0
        %1063 = vmatpush1.bf16.msra.mxu0 0
        %1064 = vmatprep.subr.bf16.mxu0 0
        %1065 = vmatpush1.bf16.msra.mxu0 0
        %1066 = vmatprep.subr.bf16.mxu0 0
        %1067 = vmatpush1.bf16.msra.mxu0 0
        %1068 = vmatprep.subr.bf16.mxu0 0
        %1069 = vmatpush1.bf16.msra.mxu0 0
        %1070 = vmatprep.subr.bf16.mxu0 0
        %1071 = vmatpush1.bf16.msra.mxu0 0
        %1072 = vmatprep.subr.bf16.mxu0 0
        %1073 = vmatpush1.bf16.msra.mxu0 0
        %1074 = vmatprep.subr.bf16.mxu0 0
        %1075 = vmatpush1.bf16.msra.mxu0 0
        %1076 = vmatprep.subr.bf16.mxu0 0
        %1077 = vmatpush1.bf16.msra.mxu0 0
        %1078 = vmatprep.mubr.bf16.mxu0 0
        %1079 = vmatmul.mubr.bf16.gmra.mrb[0].mxu0 %v1023
        %v1080 = vpop.f32.mrb[0].mxu0
        %v1081 = vadd.f32 0.0, %v1080
        %v1082 = vpop.f32.mrb[0].mxu0
        %v1083 = vpop.f32.mrb[0].mxu0
        %v1084 = vadd.f32 0.0, %v1083
        %v1085 = vpop.f32.mrb[0].mxu0
        %1086 = vmatprep.mubr.bf16.mxu0 0
        %1087 = vmatmul.mubr.bf16.gmra.mrb[0].mxu0 %v1026
        %v1088 = vpop.f32.mrb[0].mxu0
        %v1089 = vadd.f32 0.0, %v1088
        %v1090 = vpop.f32.mrb[0].mxu0
        %v1091 = vpop.f32.mrb[0].mxu0
        %v1092 = vadd.f32 0.0, %v1091
        %v1093 = vpop.f32.mrb[0].mxu0
        %1094 = vmatprep.mubr.bf16.mxu0 0
        %1095 = vmatmul.mubr.bf16.gmra.mrb[0].mxu0 %v1029
        %v1096 = vpop.f32.mrb[0].mxu0
        %v1097 = vadd.f32 0.0, %v1096
        %v1098 = vpop.f32.mrb[0].mxu0
        %v1099 = vpop.f32.mrb[0].mxu0
        %v1100 = vadd.f32 0.0, %v1099
        %v1101 = vpop.f32.mrb[0].mxu0
        %1102 = vmatprep.mubr.bf16.mxu0 0
        %1103 = vmatmul.mubr.bf16.gmra.mrb[0].mxu0 %v1032
        %v1104 = vpop.f32.mrb[0].mxu0
        %v1105 = vadd.f32 0.0, %v1104
        %v1106 = vpop.f32.mrb[0].mxu0
        %v1107 = vpop.f32.mrb[0].mxu0
        %v1108 = vadd.f32 0.0, %v1107
        %v1109 = vpop.f32.mrb[0].mxu0
        %1110 = vmatprep.mubr.bf16.mxu0 0
        %1111 = vmatmul.mubr.bf16.gmra.mrb[0].mxu0 %v1035
        %v1112 = vpop.f32.mrb[0].mxu0
        %v1113 = vadd.f32 0.0, %v1112
        %v1114 = vpop.f32.mrb[0].mxu0
        %v1115 = vpop.f32.mrb[0].mxu0
        %v1116 = vadd.f32 0.0, %v1115
        %v1117 = vpop.f32.mrb[0].mxu0
        %1118 = vmatprep.mubr.bf16.mxu0 0
        %1119 = vmatmul.mubr.bf16.gmra.mrb[0].mxu0 %v1038
        %v1120 = vpop.f32.mrb[0].mxu0
        %v1121 = vadd.f32 0.0, %v1120
        %v1122 = vpop.f32.mrb[0].mxu0
        %v1123 = vpop.f32.mrb[0].mxu0
        %v1124 = vadd.f32 0.0, %v1123
        %v1125 = vpop.f32.mrb[0].mxu0
        %1126 = vmatprep.mubr.bf16.mxu0 0
        %1127 = vmatmul.mubr.bf16.gmra.mrb[0].mxu0 %v1041
        %v1128 = vpop.f32.mrb[0].mxu0
        %v1129 = vadd.f32 0.0, %v1128
        %v1130 = vpop.f32.mrb[0].mxu0
        %v1131 = vpop.f32.mrb[0].mxu0
        %v1132 = vadd.f32 0.0, %v1131
        %v1133 = vpop.f32.mrb[0].mxu0
        %1134 = vmatprep.mubr.bf16.mxu0 0
        %1135 = vmatmul.mubr.bf16.gmra.mrb[0].mxu0 %v1044
        %v1136 = vpop.f32.mrb[0].mxu0
        %v1137 = vadd.f32 0.0, %v1136
        %v1138 = vpop.f32.mrb[0].mxu0
        %v1139 = vpop.f32.mrb[0].mxu0
        %v1140 = vadd.f32 0.0, %v1139
        %v1141 = vpop.f32.mrb[0].mxu0
        %1142 = vdwg.mxu0
        %v1143 = vadd.f32 %v944, %v1081
        %v1144 = vadd.f32 %v947, %v1084
        %v1145 = vadd.f32 %v952, %v1089
        %v1146 = vadd.f32 %v955, %v1092
        %v1147 = vadd.f32 %v960, %v1097
        %v1148 = vadd.f32 %v963, %v1100
        %v1149 = vadd.f32 %v968, %v1105
        %v1150 = vadd.f32 %v971, %v1108
        %v1151 = vadd.f32 %v976, %v1113
        %v1152 = vadd.f32 %v979, %v1116
        %v1153 = vadd.f32 %v984, %v1121
        %v1154 = vadd.f32 %v987, %v1124
        %v1155 = vadd.f32 %v992, %v1129
        %v1156 = vadd.f32 %v995, %v1132
        %v1157 = vadd.f32 %v1000, %v1137
        %v1158 = vadd.f32 %v1003, %v1140
        %v1159 = vld [vmem:[%s7] sm:$0x1]
        %v1161 = vlaneseq
        %v1162 = vshrl.u32 %v1161, 7
        %v1163 = vsub.s32 0, %v1162
        %v1164 = vrot.slane %v1159, %v1163
        %v1166 = vadd.f32 %v1143, %v1164
        %v1167 = vadd.f32 %v1144, %v1164
        %v1168 = vadd.f32 %v1145, %v1164
        %v1169 = vadd.f32 %v1146, %v1164
        %v1170 = vadd.f32 %v1147, %v1164
        %v1171 = vadd.f32 %v1148, %v1164
        %v1172 = vadd.f32 %v1149, %v1164
        %v1173 = vadd.f32 %v1150, %v1164
        %v1174 = vadd.f32 %v1151, %v1164
        %v1175 = vadd.f32 %v1152, %v1164
        %v1176 = vadd.f32 %v1153, %v1164
        %v1177 = vadd.f32 %v1154, %v1164
        %v1178 = vadd.f32 %v1155, %v1164
        %v1179 = vadd.f32 %v1156, %v1164
        %v1180 = vadd.f32 %v1157, %v1164
        %v1181 = vadd.f32 %v1158, %v1164
        %v1182 = vmul.f32 %v1166, 0.2
        %v1183 = vmul.f32 %v1167, 0.2
        %v1184 = vmul.f32 %v1168, 0.2
        %v1185 = vmul.f32 %v1169, 0.2
        %v1186 = vmul.f32 %v1170, 0.2
        %v1187 = vmul.f32 %v1171, 0.2
        %v1188 = vmul.f32 %v1172, 0.2
        %v1189 = vmul.f32 %v1173, 0.2
        %v1190 = vmul.f32 %v1174, 0.2
        %v1191 = vmul.f32 %v1175, 0.2
        %v1192 = vmul.f32 %v1176, 0.2
        %v1193 = vmul.f32 %v1177, 0.2
        %v1194 = vmul.f32 %v1178, 0.2
        %v1195 = vmul.f32 %v1179, 0.2
        %v1196 = vmul.f32 %v1180, 0.2
        %v1197 = vmul.f32 %v1181, 0.2
        %v1198 = vmax.f32 %v1166, %v1182
        %v1199 = vmax.f32 %v1167, %v1183
        %v1200 = vmax.f32 %v1168, %v1184
        %v1201 = vmax.f32 %v1169, %v1185
        %v1202 = vmax.f32 %v1170, %v1186
        %v1203 = vmax.f32 %v1171, %v1187
        %v1204 = vmax.f32 %v1172, %v1188
        %v1205 = vmax.f32 %v1173, %v1189
        %v1206 = vmax.f32 %v1174, %v1190
        %v1207 = vmax.f32 %v1175, %v1191
        %v1208 = vmax.f32 %v1176, %v1192
        %v1209 = vmax.f32 %v1177, %v1193
        %v1210 = vmax.f32 %v1178, %v1194
        %v1211 = vmax.f32 %v1179, %v1195
        %v1212 = vmax.f32 %v1180, %v1196
        %v1213 = vmax.f32 %v1181, %v1197
        %v1214 = vpack.c.bf16 %v1199, %v1198
        %v1215 = vpack.c.bf16 %v1201, %v1200
        %v1216 = vpack.c.bf16 %v1203, %v1202
        %v1217 = vpack.c.bf16 %v1205, %v1204
        %v1218 = vpack.c.bf16 %v1207, %v1206
        %v1219 = vpack.c.bf16 %v1209, %v1208
        %v1220 = vpack.c.bf16 %v1211, %v1210
        %v1221 = vpack.c.bf16 %v1213, %v1212
        %v1230 = vunpack.c.l.b16 %v1214
        %v1231 = vunpack.c.h.b16 %v1214
        %v1232 = vunpack.c.l.b16 %v1215
        %v1233 = vunpack.c.h.b16 %v1215
        %v1234 = vunpack.c.l.b16 %v1216
        %v1235 = vunpack.c.h.b16 %v1216
        %v1236 = vunpack.c.l.b16 %v1217
        %v1237 = vunpack.c.h.b16 %v1217
        %v1238 = vunpack.c.l.b16 %v1218
        %v1239 = vunpack.c.h.b16 %v1218
        %v1240 = vunpack.c.l.b16 %v1219
        %v1241 = vunpack.c.h.b16 %v1219
        %v1242 = vunpack.c.l.b16 %v1220
        %v1243 = vunpack.c.h.b16 %v1220
        %v1244 = vunpack.c.l.b16 %v1221
        %v1245 = vunpack.c.h.b16 %v1221
        %v1246 = vpack.c.b16 %v1230, %v1230
        %v1247 = vpack.c.b16 %v1231, %v1231
        %v1248 = vpack.c.b16 %v1232, %v1232
        %v1249 = vpack.c.b16 %v1233, %v1233
        %v1250 = vpack.c.b16 %v1234, %v1234
        %v1251 = vpack.c.b16 %v1235, %v1235
        %v1252 = vpack.c.b16 %v1236, %v1236
        %v1253 = vpack.c.b16 %v1237, %v1237
        %v1254 = vpack.c.b16 %v1238, %v1238
        %v1255 = vpack.c.b16 %v1239, %v1239
        %v1256 = vpack.c.b16 %v1240, %v1240
        %v1257 = vpack.c.b16 %v1241, %v1241
        %v1258 = vpack.c.b16 %v1242, %v1242
        %v1259 = vpack.c.b16 %v1243, %v1243
        %v1260 = vpack.c.b16 %v1244, %v1244
        %v1261 = vpack.c.b16 %v1245, %v1245
        %1278 = vst [vmem:[%s377] sm:$0xf] %v1246
        %1279 = vst [vmem:[%s377 + $0x4] sm:$0xf] %v1247
        %1280 = vst [vmem:[%s377 + $0x8] sm:$0xf] %v1248
        %1281 = vst [vmem:[%s377 + $0xc] sm:$0xf] %v1249
        %1282 = vst [vmem:[%s377 + $0x10] sm:$0xf] %v1250
        %1283 = vst [vmem:[%s377 + $0x14] sm:$0xf] %v1251
        %1284 = vst [vmem:[%s377 + $0x18] sm:$0xf] %v1252
        %1285 = vst [vmem:[%s377 + $0x1c] sm:$0xf] %v1253
        %1286 = vst [vmem:[%s377 + $0x20] sm:$0xf] %v1254
        %1287 = vst [vmem:[%s377 + $0x24] sm:$0xf] %v1255
        %1288 = vst [vmem:[%s377 + $0x28] sm:$0xf] %v1256
        %1289 = vst [vmem:[%s377 + $0x2c] sm:$0xf] %v1257
        %1290 = vst [vmem:[%s377 + $0x30] sm:$0xf] %v1258
        %1291 = vst [vmem:[%s377 + $0x34] sm:$0xf] %v1259
        %1292 = vst [vmem:[%s377 + $0x38] sm:$0xf] %v1260
        %1293 = vst [vmem:[%s377 + $0x3c] sm:$0xf] %v1261
        %s1294 = sand.u32 %s224, 1
        %s1295 = scalar_lea.sflag [#allocation3], %s1294
        %s1296 = sand.u32 %s224, 1
        %s1297 = smul.addr %s1296, 64
        %s1298 = scalar_lea.vmem [#allocation5], %s1297
        // Predicated region
        $region57: #{tpu_custom_call.1} parent=51 // pred_check
          %p1299 = pneg %p234
        $region58: #{tpu_custom_call.1} parent=51 // pred_check_branch
          %1301 = sbr.rel (%p1299) target = $region60
        $region59: #{tpu_custom_call.1} parent=51 // pred_region
          %s1302 = smul.u32 16, %s23
          %s1304 = ssub.s32 1024, 1024
          %1305 = vsyncadd %s1295, %s1304
          %s1306 = smul.addr %s1302, 64
          %s1307 = scalar_lea.hbm %s8, %s1306
          %s1308 = sshll.u32 %s1298, 4
          %s1309 = int_to_ptr.vmem [resolvable:$true] %s1308
          %1314 = dma.vmem_to_hbm [thread:$0]  %s1309, 1024, %s1307, %s1295, 64, 64, 4
        $region60: #{tpu_custom_call.1} parent=51 // pred_fallthru
          _
      $region52: #{tpu_custom_call.1} parent=5 // pred_fallthru
        _
      %p1315 = scmp.le.s32.totalorder 2, %s18
      // Predicated region
      $region61: #{tpu_custom_call.1} parent=5 // pred_check
        %p1316 = pneg %p1315
      $region62: #{tpu_custom_call.1} parent=5 // pred_check_branch
        %1318 = sbr.rel (%p1316) target = $region64
      $region63: #{tpu_custom_call.1} parent=5 // pred_region
        %s1319 = ssub.s32 %s18, 2
        // Predicated region
        $region65: #{tpu_custom_call.1} parent=63 // pred_check
          %p1320 = pneg %p240
        $region66: #{tpu_custom_call.1} parent=63 // pred_check_branch
          %1322 = sbr.rel (%p1320) target = $region68
        $region67: #{tpu_custom_call.1} parent=63 // pred_region
          %s1323 = sand.u32 %s225, 1
          %s1324 = scalar_lea.sflag [#allocation3], %s1323
          %s1325 = sand.u32 %s225, 1
          %s1326 = smul.addr %s1325, 64
          %s1327 = scalar_lea.vmem [#allocation5], %s1326
          %1328 = dma.done %s1324, 1024
        $region68: #{tpu_custom_call.1} parent=63 // pred_fallthru
          _
      $region64: #{tpu_custom_call.1} parent=5 // pred_fallthru
        _
    $region6: #{tpu_custom_call.1} parent=1 // loop_footer
      %s22 = sadd.s32 1, %s18
    $region7: #{tpu_custom_call.1} parent=1 // loop_footer_branch
      %17 = sbr.rel target = $region3
    $region8: #{tpu_custom_call.1} parent=1 // loop_exit
      _
    %1329 = vsyncpa [#allocation3], 1
    %s1330 = scalar_lea.sflag [#allocation3], 1
    %1331 = vsyncpa %s1330, 1
    %1332 = vsyncpa [#allocation4], 1
    %s1333 = scalar_lea.sflag [#allocation4], 1
    %1334 = vsyncpa %s1333, 1

</llo_original>
